<compile_context>
chip_gen: v6e
topology: v6e:2x2x1
jax: 0.10.0
libtpu: 0.0.40
codegen_flags: <defaults>
</compile_context>

<pallas_src>
import functools
import math

import jax
import jax.numpy as jnp
from jax.experimental import pallas as pl
from jax.experimental.pallas import tpu as pltpu

F32 = jnp.float32
BF16 = jnp.bfloat16
_SQRT_HALF = 1.0 / math.sqrt(2.0)
_VMEM_LIMIT = 40 * 1024 * 1024  # safe headroom on v7x (64 MiB phys) and v5e/v6e


# ----------------------------- in-kernel math -----------------------------

def _erf(x):
    # Abramowitz & Stegun 7.1.26, max abs error ~1.5e-7 — matches torch's exact
    # erf GELU far below the bf16-matmul noise floor. Uses only exp/mul/add/select.
    a1, a2, a3, a4, a5 = 0.254829592, -0.284496736, 1.421413741, -1.453152027, 1.061405429
    p = 0.3275911
    ax = jnp.abs(x)
    t = 1.0 / (1.0 + p * ax)
    poly = ((((a5 * t + a4) * t + a3) * t + a2) * t + a1) * t
    y = 1.0 - poly * jnp.exp(-ax * ax)
    return jnp.where(x < 0, -y, y)


def _gelu(x):
    # torch nn.GELU() default (approximate='none'): x * Phi(x)
    return 0.5 * x * (1.0 + _erf(x * _SQRT_HALF))


# ----------------------------- Pallas kernels -----------------------------

def _mlp2_single_kernel(x_ref, w1_ref, b1_ref, w2_ref, b2_ref, o_ref):
    # Fully fused Linear -> GELU -> Linear, hidden dim in one tile.
    # grid = (row tiles [parallel],)
    h = jnp.dot(x_ref[...], w1_ref[...], preferred_element_type=F32) + b1_ref[...]
    h = _gelu(h)
    y = jnp.dot(h.astype(BF16), w2_ref[...], preferred_element_type=F32) + b2_ref[...]
    o_ref[...] = y.astype(o_ref.dtype)


def _mlp2_kernel(x_ref, w1_ref, b1_ref, w2_ref, b2_ref, o_ref, acc_ref):
    # Fused Linear -> GELU -> Linear for one (row_tile, hidden_tile) grid step.
    # grid = (row tiles [parallel], hidden tiles [arbitrary reduction, last]).
    j = pl.program_id(1)

    @pl.when(j == 0)
    def _():
        acc_ref[...] = jnp.zeros_like(acc_ref)

    # bf16 operands on the MXU, f32 accumulation.
    h = jnp.dot(x_ref[...], w1_ref[...], preferred_element_type=F32) + b1_ref[...]
    h = _gelu(h)                                                    # f32, (tR, tM)
    acc_ref[...] += jnp.dot(h.astype(BF16), w2_ref[...], preferred_element_type=F32)

    @pl.when(j == pl.num_programs(1) - 1)
    def _():
        o_ref[...] = (acc_ref[...] + b2_ref[...]).astype(o_ref.dtype)


def _linear_kernel(x_ref, w_ref, b_ref, o_ref, *, apply_gelu):
    # Plain Linear (+ optional GELU); used for num_layers == 1 and for extra
    # hidden layers when num_layers > 2.
    y = jnp.dot(x_ref[...], w_ref[...], preferred_element_type=F32) + b_ref[...]
    if apply_gelu:
        y = _gelu(y)
    o_ref[...] = y.astype(o_ref.dtype)


# ----------------------------- tiling helpers -----------------------------

def _round_up(n, m):
    return ((n + m - 1) // m) * m


def _row_tile(rows):
    # Target 256-512 rows per tile (HBM-roofline sweet spot); small problems
    # take a single tile padded to a multiple of 16 (bf16 sublane packing).
    if rows <= 512:
        return _round_up(max(rows, 1), 16)
    return 512 if rows % 512 == 0 else 256


def _col_tile(n):
    # Lane-dense (multiple-of-128) feature tiles when possible, else whole dim.
    for t in (512, 256, 128):
        if n % t == 0:
            return t
    return n


def _prep_rows(x2, tile_rows):
    rows = x2.shape[0]
    rows_p = _round_up(rows, tile_rows)
    if rows_p != rows:
        x2 = jnp.pad(x2, ((0, rows_p - rows), (0, 0)))
    return x2, rows_p


# ----------------------------- pallas_call wrappers -----------------------------

def fused_mlp2(x2, w1, b1, w2, b2):
    """(rows, in) -> Linear -> GELU -> Linear, one fused kernel, f32 output."""
    rows, in_dim = x2.shape
    hidden = w1.shape[1]
    out_dim = w2.shape[1]
    t_r = _row_tile(rows)
    t_m = _col_tile(hidden)
    xp, rows_p = _prep_rows(x2.astype(BF16), t_r)
    n_k = hidden // t_m

    args = (xp, w1.astype(BF16), b1.reshape(1, hidden).astype(F32),
            w2.astype(BF16), b2.reshape(1, out_dim).astype(F32))

    if n_k == 1:
        # Hidden dim fits a single tile: scratch-free fused kernel, rows-only grid.
        out = pl.pallas_call(
            _mlp2_single_kernel,
            out_shape=jax.ShapeDtypeStruct((rows_p, out_dim), F32),
            grid=(rows_p // t_r,),
            in_specs=[
                pl.BlockSpec((t_r, in_dim), lambda i: (i, 0)),
                pl.BlockSpec((in_dim, hidden), lambda i: (0, 0)),
                pl.BlockSpec((1, hidden), lambda i: (0, 0)),
                pl.BlockSpec((hidden, out_dim), lambda i: (0, 0)),
                pl.BlockSpec((1, out_dim), lambda i: (0, 0)),
            ],
            out_specs=pl.BlockSpec((t_r, out_dim), lambda i: (i, 0)),
            compiler_params=pltpu.CompilerParams(
                dimension_semantics=("parallel",),
                vmem_limit_bytes=_VMEM_LIMIT),
        )(*args)
    else:
        out = pl.pallas_call(
            _mlp2_kernel,
            out_shape=jax.ShapeDtypeStruct((rows_p, out_dim), F32),
            grid=(rows_p // t_r, n_k),
            in_specs=[
                pl.BlockSpec((t_r, in_dim), lambda i, j: (i, 0)),
                pl.BlockSpec((in_dim, t_m), lambda i, j: (0, j)),
                pl.BlockSpec((1, t_m), lambda i, j: (0, j)),
                pl.BlockSpec((t_m, out_dim), lambda i, j: (j, 0)),
                pl.BlockSpec((1, out_dim), lambda i, j: (0, 0)),
            ],
            out_specs=pl.BlockSpec((t_r, out_dim), lambda i, j: (i, 0)),
            scratch_shapes=[pltpu.VMEM((t_r, out_dim), F32)],
            compiler_params=pltpu.CompilerParams(
                dimension_semantics=("parallel", "arbitrary"),
                vmem_limit_bytes=_VMEM_LIMIT),
        )(*args)
    return out[:rows]


def linear(x2, w, b, *, apply_gelu=False, out_dtype=F32):
    """(rows, in) @ (in, out) + b, optional GELU. Rows x out-columns grid."""
    rows, in_dim = x2.shape
    out_dim = w.shape[1]
    t_r = _row_tile(rows)
    t_n = _col_tile(out_dim)
    xp, rows_p = _prep_rows(x2.astype(BF16), t_r)
    grid = (rows_p // t_r, out_dim // t_n)
    out = pl.pallas_call(
        functools.partial(_linear_kernel, apply_gelu=apply_gelu),
        out_shape=jax.ShapeDtypeStruct((rows_p, out_dim), out_dtype),
        grid=grid,
        in_specs=[
            pl.BlockSpec((t_r, in_dim), lambda i, j: (i, 0)),
            pl.BlockSpec((in_dim, t_n), lambda i, j: (0, j)),
            pl.BlockSpec((1, t_n), lambda i, j: (0, j)),
        ],
        out_specs=pl.BlockSpec((t_r, t_n), lambda i, j: (i, j)),
        compiler_params=pltpu.CompilerParams(
            dimension_semantics=("parallel", "parallel"),
            vmem_limit_bytes=_VMEM_LIMIT),
    )(xp, w.astype(BF16), b.reshape(1, out_dim).astype(F32))
    return out[:rows]


# ----------------------------- forward (matches MLPEmbedder.forward) -----------------------------

def mlp_embedder_forward(x, params):
    """params: list of (w, b), w stored (in, out); GELU between consecutive linears."""
    lead = x.shape[:-1]
    in_dim = x.shape[-1]
    rows = math.prod(lead) if lead else 1
    h = x.reshape(rows, in_dim)

    if len(params) == 1:
        (w, b), = params
        y = linear(h, w, b, apply_gelu=False, out_dtype=F32)
    else:
        # Any extra hidden layers (num_layers > 2) run as Linear+GELU passes
        # (intermediate activations kept bf16); the last two layers are fused.
        for w, b in params[:-2]:
            h = linear(h, w, b, apply_gelu=True, out_dtype=BF16)
        (w1, b1), (w2, b2) = params[-2], params[-1]
        y = fused_mlp2(h, w1, b1, w2, b2)
    return y.reshape(*lead, y.shape[-1])


# ----------------------------- parameter init (mirrors the torch ctor) -----------------------------

def init_mlp_embedder(key, in_dim, out_dim, hidden_dim=None, num_layers=2):
    layers = max(num_layers, 1)
    if layers == 1:
        dims = [(in_dim, out_dim)]
    else:
        if hidden_dim is None:
            hidden_dim = max(in_dim, out_dim)
        dims = [(in_dim, hidden_dim)]
        dims += [(hidden_dim, hidden_dim)] * (layers - 2)
        dims += [(hidden_dim, out_dim)]
    params = []
    for fan_in, fan_out in dims:
        key, kw, kb = jax.random.split(key, 3)
        bound = 1.0 / math.sqrt(fan_in)  # torch nn.Linear default init range
        w = jax.random.uniform(kw, (fan_in, fan_out), F32, -bound, bound)
        b = jax.random.uniform(kb, (fan_out,), F32, -bound, bound)
        params.append((w, b))
    return params


def mlp_embedder_ref(x, params):
    # Pure-JAX f32 reference (exact erf GELU, like torch nn.GELU default).
    h = x.astype(F32)
    for idx, (w, b) in enumerate(params):
        h = h @ w + b
        if idx != len(params) - 1:
            h = 0.5 * h * (1.0 + jax.lax.erf(h * _SQRT_HALF))
    return h


if __name__ == "__main__":
    # MLPEmbedder(in_dim=32, out_dim=64) -> hidden_dim = max(32, 64) = 64, num_layers = 2
    B, L = 2, 8
    in_dim, out_dim = 32, 64

    key = jax.random.PRNGKey(0)
    kx, kp = jax.random.split(key)
    x = jax.random.normal(kx, (B, L, in_dim), dtype=F32)
    params = init_mlp_embedder(kp, in_dim, out_dim)  # defaults: hidden=None, num_layers=2

    fwd = jax.jit(lambda xi: mlp_embedder_forward(xi, params))
    y = fwd(x)
    jax.block_until_ready(y)

    y_ref = mlp_embedder_ref(x, params)
    assert y.shape == (B, L, out_dim)
    assert bool(jnp.isfinite(y).all())
    max_err = float(jnp.max(jnp.abs(y - y_ref)))
    assert max_err < 5e-2, f"max abs err vs f32 reference: {max_err}"
    # TODO(synk): torch's nn.GELU default is exact erf; matched here via an in-kernel
    # polynomial erf (|err|<1.5e-7). Remaining deviation is from bf16 MXU operands.
    print("KERNEL_OK")
</pallas_src>

<mosaic_0001>
module attributes {stable_mosaic.version = 11 : i64} {
  func.func @_mlp2_single_kernel(%arg0: i32, %arg1: memref<16x32xbf16, #tpu.memory_space<vmem>>, %arg2: memref<32x64xbf16, #tpu.memory_space<vmem>>, %arg3: memref<1x64xf32, #tpu.memory_space<vmem>>, %arg4: memref<64x64xbf16, #tpu.memory_space<vmem>>, %arg5: memref<1x64xf32, #tpu.memory_space<vmem>>, %arg6: memref<16x64xf32, #tpu.memory_space<vmem>>) attributes {dimension_semantics = [#tpu.dimension_semantics<parallel>], iteration_bounds = array<i64: 1>, scalar_prefetch = 0 : i64, scratch_operands = 0 : i64, tpu.core_type = #tpu.core_type<tc>, window_params = [{transform_indices = @transform_0, window_bounds = array<i64: 16, 32>}, {pipeline_mode = #tpu.pipeline_mode<synchronous>, transform_indices = @transform_1, window_bounds = array<i64: 32, 64>}, {pipeline_mode = #tpu.pipeline_mode<synchronous>, transform_indices = @transform_2, window_bounds = array<i64: 1, 64>}, {pipeline_mode = #tpu.pipeline_mode<synchronous>, transform_indices = @transform_3, window_bounds = array<i64: 64, 64>}, {pipeline_mode = #tpu.pipeline_mode<synchronous>, transform_indices = @transform_4, window_bounds = array<i64: 1, 64>}, {transform_indices = @transform_5, window_bounds = array<i64: 16, 64>}]} {
    %c0 = arith.constant 0 : index
    %c0_0 = arith.constant 0 : index
    %0 = vector.load %arg1[%c0, %c0_0] : memref<16x32xbf16, #tpu.memory_space<vmem>>, vector<16x32xbf16>
    %c0_1 = arith.constant 0 : index
    %c0_2 = arith.constant 0 : index
    %1 = vector.load %arg2[%c0_1, %c0_2] : memref<32x64xbf16, #tpu.memory_space<vmem>>, vector<32x64xbf16>
    %cst = arith.constant dense<0.000000e+00> : vector<16x64xf32>
    %2 = tpu.matmul %0, %1, %cst {dimension_numbers = #tpu.dot_dimension_numbers<[1], [0], [0], [1], [0, 0, 1, 1], [], []>} : vector<16x32xbf16>, vector<32x64xbf16>, vector<16x64xf32> -> vector<16x64xf32>
    %c0_3 = arith.constant 0 : index
    %c0_4 = arith.constant 0 : index
    %3 = vector.load %arg3[%c0_3, %c0_4] : memref<1x64xf32, #tpu.memory_space<vmem>>, vector<1x64xf32>
    %4 = vector.broadcast %3 : vector<1x64xf32> to vector<16x64xf32>
    %5 = arith.addf %2, %4 : vector<16x64xf32>
    %cst_5 = arith.constant 5.000000e-01 : f32
    %6 = vector.broadcast %cst_5 : f32 to vector<16x64xf32>
    %7 = arith.mulf %6, %5 : vector<16x64xf32>
    %cst_6 = arith.constant 0.707106769 : f32
    %8 = vector.broadcast %cst_6 : f32 to vector<16x64xf32>
    %9 = arith.mulf %5, %8 : vector<16x64xf32>
    %10 = math.absf %9 : vector<16x64xf32>
    %cst_7 = arith.constant 0.327591091 : f32
    %11 = vector.broadcast %cst_7 : f32 to vector<16x64xf32>
    %12 = arith.mulf %11, %10 : vector<16x64xf32>
    %cst_8 = arith.constant 1.000000e+00 : f32
    %13 = vector.broadcast %cst_8 : f32 to vector<16x64xf32>
    %14 = arith.addf %13, %12 : vector<16x64xf32>
    %cst_9 = arith.constant 1.000000e+00 : f32
    %15 = vector.broadcast %cst_9 : f32 to vector<16x64xf32>
    %16 = arith.divf %15, %14 : vector<16x64xf32>
    %cst_10 = arith.constant 1.06140542 : f32
    %17 = vector.broadcast %cst_10 : f32 to vector<16x64xf32>
    %18 = arith.mulf %17, %16 : vector<16x64xf32>
    %cst_11 = arith.constant -1.45315206 : f32
    %19 = vector.broadcast %cst_11 : f32 to vector<16x64xf32>
    %20 = arith.addf %18, %19 : vector<16x64xf32>
    %21 = arith.mulf %20, %16 : vector<16x64xf32>
    %cst_12 = arith.constant 1.42141378 : f32
    %22 = vector.broadcast %cst_12 : f32 to vector<16x64xf32>
    %23 = arith.addf %21, %22 : vector<16x64xf32>
    %24 = arith.mulf %23, %16 : vector<16x64xf32>
    %cst_13 = arith.constant -0.284496725 : f32
    %25 = vector.broadcast %cst_13 : f32 to vector<16x64xf32>
    %26 = arith.addf %24, %25 : vector<16x64xf32>
    %27 = arith.mulf %26, %16 : vector<16x64xf32>
    %cst_14 = arith.constant 0.254829586 : f32
    %28 = vector.broadcast %cst_14 : f32 to vector<16x64xf32>
    %29 = arith.addf %27, %28 : vector<16x64xf32>
    %30 = arith.mulf %29, %16 : vector<16x64xf32>
    %cst_15 = arith.constant 0.000000e+00 : f32
    %31 = vector.broadcast %cst_15 : f32 to vector<16x64xf32>
    %32 = arith.subf %31, %10 : vector<16x64xf32>
    %33 = arith.mulf %32, %10 : vector<16x64xf32>
    %34 = math.exp %33 : vector<16x64xf32>
    %35 = arith.mulf %30, %34 : vector<16x64xf32>
    %cst_16 = arith.constant 1.000000e+00 : f32
    %36 = vector.broadcast %cst_16 : f32 to vector<16x64xf32>
    %37 = arith.subf %36, %35 : vector<16x64xf32>
    %cst_17 = arith.constant 0.000000e+00 : f32
    %38 = vector.broadcast %cst_17 : f32 to vector<16x64xf32>
    %39 = arith.cmpf olt, %9, %38 : vector<16x64xf32>
    %cst_18 = arith.constant 0.000000e+00 : f32
    %40 = vector.broadcast %cst_18 : f32 to vector<16x64xf32>
    %41 = arith.subf %40, %37 : vector<16x64xf32>
    %42 = arith.select %39, %41, %37 : vector<16x64xi1>, vector<16x64xf32>
    %cst_19 = arith.constant 1.000000e+00 : f32
    %43 = vector.broadcast %cst_19 : f32 to vector<16x64xf32>
    %44 = arith.addf %43, %42 : vector<16x64xf32>
    %45 = arith.mulf %7, %44 : vector<16x64xf32>
    %46 = arith.truncf %45 : vector<16x64xf32> to vector<16x64xbf16>
    %c0_20 = arith.constant 0 : index
    %c0_21 = arith.constant 0 : index
    %47 = vector.load %arg4[%c0_20, %c0_21] : memref<64x64xbf16, #tpu.memory_space<vmem>>, vector<64x64xbf16>
    %cst_22 = arith.constant dense<0.000000e+00> : vector<16x64xf32>
    %48 = tpu.matmul %46, %47, %cst_22 {dimension_numbers = #tpu.dot_dimension_numbers<[1], [0], [0], [1], [0, 0, 1, 1], [], []>} : vector<16x64xbf16>, vector<64x64xbf16>, vector<16x64xf32> -> vector<16x64xf32>
    %c0_23 = arith.constant 0 : index
    %c0_24 = arith.constant 0 : index
    %49 = vector.load %arg5[%c0_23, %c0_24] : memref<1x64xf32, #tpu.memory_space<vmem>>, vector<1x64xf32>
    %50 = vector.broadcast %49 : vector<1x64xf32> to vector<16x64xf32>
    %51 = arith.addf %48, %50 : vector<16x64xf32>
    %c0_25 = arith.constant 0 : index
    %c0_26 = arith.constant 0 : index
    %52 = vector.load %arg6[%c0_25, %c0_26] : memref<16x64xf32, #tpu.memory_space<vmem>>, vector<16x64xf32>
    tpu.vector_store %arg6[%c0_25, %c0_26], %51 {strides = array<i32>} : memref<16x64xf32, #tpu.memory_space<vmem>>, vector<16x64xf32>,
    return
  }
  func.func @transform_0(%arg0: i32) -> (i32, i32) {
    %c0_i32 = arith.constant 0 : i32
    %c0_i32_0 = arith.constant 0 : i32
    return %arg0, %c0_i32 : i32, i32
  }
  func.func @transform_1(%arg0: i32) -> (i32, i32) {
    %c0_i32 = arith.constant 0 : i32
    %c0_i32_0 = arith.constant 0 : i32
    %c0_i32_1 = arith.constant 0 : i32
    return %c0_i32, %c0_i32_0 : i32, i32
  }
  func.func @transform_2(%arg0: i32) -> (i32, i32) {
    %c0_i32 = arith.constant 0 : i32
    %c0_i32_0 = arith.constant 0 : i32
    %c0_i32_1 = arith.constant 0 : i32
    return %c0_i32, %c0_i32_0 : i32, i32
  }
  func.func @transform_3(%arg0: i32) -> (i32, i32) {
    %c0_i32 = arith.constant 0 : i32
    %c0_i32_0 = arith.constant 0 : i32
    %c0_i32_1 = arith.constant 0 : i32
    return %c0_i32, %c0_i32_0 : i32, i32
  }
  func.func @transform_4(%arg0: i32) -> (i32, i32) {
    %c0_i32 = arith.constant 0 : i32
    %c0_i32_0 = arith.constant 0 : i32
    %c0_i32_1 = arith.constant 0 : i32
    return %c0_i32, %c0_i32_0 : i32, i32
  }
  func.func @transform_5(%arg0: i32) -> (i32, i32) {
    %c0_i32 = arith.constant 0 : i32
    %c0_i32_0 = arith.constant 0 : i32
    return %arg0, %c0_i32 : i32, i32
  }
}

</mosaic_0001>

<llo_original>
// kernel: _lambda_.1
$region0: #{_lambda_.1}
  #allocation0 [shape = 'u32[]', space=smem, size = 0x4, offset = 0x4, fixed_abs, tag = 'smem constant byte address 0x4 - core index']
  #allocation1 [shape = 'u32[144,128]{1,0:T(1,128)}', space=vmem, size = 0x12000, scoped, tag = 'internal scratch']
  %s0 = inlined_call_operand.vmem [shape: bf16[16,32], index: 0, kind: input, shape index: {}]
  %s1 = inlined_call_operand.vmem [shape: bf16[32,64], index: 1, kind: input, shape index: {}]
  %s2 = inlined_call_operand.vmem [shape: f32[1,64], index: 2, kind: input, shape index: {}]
  %s3 = inlined_call_operand.hbm [shape: bf16[64,64], index: 3, kind: input, shape index: {}]
  %s4 = inlined_call_operand.vmem [shape: f32[1,64], index: 4, kind: input, shape index: {}]
  %s5 = inlined_call_operand.hbm [shape: f32[16,64], index: 5, kind: output, shape index: {}]
  %s6 = sld [smem:[#allocation0]]
  $region34: #{_lambda_.1} parent=0
    _
  %s8 = ssub.s32 1, %s6
  %s9 = scalar_select 0, %s8, %s6
  $region1: #{_lambda_.1} parent=0
    #allocation2 [shape = 'u8[16384]{0}', space=vmem, size = 0x4000, scoped, tag = 'input window, operand 3, single buffered']
    #allocation3 [shape = 's32[1]{0}', space=sflag, size = 0x4, scoped, tag = 'scoped memory for _lambda_.1']
    #allocation4 [shape = 's32[1]{0}', space=sflag, size = 0x4, scoped, tag = 'scoped memory for _lambda_.1']
    #allocation5 [shape = 'u8[8192]{0}', space=vmem, size = 0x2000, scoped, tag = 'output window, operand 0, single buffered']
    %10 = vsyncpa [#allocation3], 0
    %11 = vsyncpa [#allocation4], 0
    // Predicated region
    $region2: #{_lambda_.1} parent=1 // pred_check
      _
    $region3: #{_lambda_.1} parent=1 // pred_check_branch
      %13 = sbr.rel (0) target = $region5
    $region4: #{_lambda_.1} parent=1 // pred_region
      _
    $region5: #{_lambda_.1} parent=1 // pred_fallthru
      _
    // Predicated region
    $region6: #{_lambda_.1} parent=1 // pred_check
      _
    $region7: #{_lambda_.1} parent=1 // pred_check_branch
      %15 = sbr.rel (0) target = $region9
    $region8: #{_lambda_.1} parent=1 // pred_region
      _
    $region9: #{_lambda_.1} parent=1 // pred_fallthru
      _
    // Predicated region
    $region10: #{_lambda_.1} parent=1 // pred_check
      _
    $region11: #{_lambda_.1} parent=1 // pred_check_branch
      %17 = sbr.rel (0) target = $region13
    $region12: #{_lambda_.1} parent=1 // pred_region
      _
    $region13: #{_lambda_.1} parent=1 // pred_fallthru
      _
    // Predicated region
    $region14: #{_lambda_.1} parent=1 // pred_check
      _
    $region15: #{_lambda_.1} parent=1 // pred_check_branch
      %19 = sbr.rel (0) target = $region17
    $region16: #{_lambda_.1} parent=1 // pred_region
      %s21 = ssub.s32 512, 512
      %22 = vsyncadd [#allocation3], %s21
      %s23 = sshll.u32 [#allocation2], 4
      %s24 = int_to_ptr.vmem [resolvable:$true] %s23
      %29 = dma.hbm_to_vmem [thread:$0]  %s3, 512, %s24, [#allocation3], 64, 64, 4
    $region17: #{_lambda_.1} parent=1 // pred_fallthru
      _
    // Predicated region
    $region18: #{_lambda_.1} parent=1 // pred_check
      _
    $region19: #{_lambda_.1} parent=1 // pred_check_branch
      %31 = sbr.rel (0) target = $region21
    $region20: #{_lambda_.1} parent=1 // pred_region
      _
    $region21: #{_lambda_.1} parent=1 // pred_fallthru
      _
    // Predicated region
    $region22: #{_lambda_.1} parent=1 // pred_check
      _
    $region23: #{_lambda_.1} parent=1 // pred_check_branch
      %33 = sbr.rel (0) target = $region25
    $region24: #{_lambda_.1} parent=1 // pred_region
      %34 = dma.done [#allocation3], 512
    $region25: #{_lambda_.1} parent=1 // pred_fallthru
      _
    %v36 = vld [vmem:[%s0] sm:$0xf]
    %v37 = vld [vmem:[%s0 + $0x4] sm:$0xf]
    %v38 = vld [vmem:[%s1] sm:$0xf]
    %v39 = vld [vmem:[%s1 + $0x4] sm:$0xf]
    %v40 = vld [vmem:[%s1 + $0x8] sm:$0xf]
    %v41 = vld [vmem:[%s1 + $0xc] sm:$0xf]
    %v42 = vld [vmem:[%s2] sm:$0x1]
    %v44 = vlaneseq
    %v45 = vshrl.u32 %v44, 7
    %v46 = vsub.s32 0, %v45
    %v47 = vrot.slane %v42, %v46
    %v51 = vunpack.c.l.b16 %v36
    %v52 = vunpack.c.l.b16 %v37
    %v53 = vpack.c.b16 %v52, %v51
    %v58 = vunpack.c.l.b16 %v38
    %v59 = vunpack.c.l.b16 %v39
    %v60 = vunpack.c.l.b16 %v40
    %v61 = vunpack.c.l.b16 %v41
    %v62 = vpack.c.b16 %v59, %v58
    %v63 = vpack.c.b16 %v61, %v60
    %vm66 = vcmask 261120
    %v68 = vsel %vm66, %v53, 0
    %70 = vmatprep.subr.bf16.mxu0 0
    %71 = vmatpush1.bf16.msra.mxu0 0
    %72 = vmatprep.subr.bf16.mxu0 0
    %73 = vmatpush1.bf16.msra.mxu0 0
    %74 = vmatprep.subr.bf16.mxu0 0
    %75 = vmatpush1.bf16.msra.mxu0 0
    %76 = vmatprep.subr.bf16.mxu0 0
    %77 = vmatpush1.bf16.msra.mxu0 0
    %78 = vmatprep.subr.bf16.mxu0 0
    %79 = vmatpush1.bf16.msra.mxu0 0
    %80 = vmatprep.subr.bf16.mxu0 0
    %81 = vmatpush1.bf16.msra.mxu0 0
    %82 = vmatprep.subr.bf16.mxu0 0
    %83 = vmatpush1.bf16.msra.mxu0 %v63
    %84 = vmatprep.subr.bf16.mxu0 0
    %85 = vmatpush1.bf16.msra.mxu0 %v62
    %86 = vmatprep.subr.bf16.mxu0 0
    %87 = vmatpush2.bf16.msra.mxu0 0
    %88 = vmatprep.subr.bf16.mxu0 0
    %89 = vmatpush2.bf16.msra.mxu0 0
    %90 = vmatprep.subr.bf16.mxu0 0
    %91 = vmatpush2.bf16.msra.mxu0 0
    %92 = vmatprep.subr.bf16.mxu0 0
    %93 = vmatpush2.bf16.msra.mxu0 0
    %94 = vmatprep.subr.bf16.mxu0 0
    %95 = vmatpush2.bf16.msra.mxu0 0
    %96 = vmatprep.subr.bf16.mxu0 0
    %97 = vmatpush2.bf16.msra.mxu0 0
    %98 = vmatprep.subr.bf16.mxu0 0
    %99 = vmatpush2.bf16.msra.mxu0 0
    %100 = vmatprep.subr.bf16.mxu0 0
    %101 = vmatpush2.bf16.msra.mxu0 0
    %102 = vmatprep.mubr.bf16.mxu0 0
    %103 = vmatmul.mubr.bf16.gmra.mxu0 %v68
    %v104 = vpop.f32.mrf.mxu0
    %v105 = vadd.f32 %v47, %v104
    %v106 = vpop.f32.mrf.mxu0
    %v107 = vpop.f32.mrf.mxu0
    %v108 = vadd.f32 %v47, %v107
    %v109 = vpop.f32.mrf.mxu0
    %110 = vdwg.mxu0
    %v111 = vmul.f32 %v105, 0.5
    %v112 = vmul.f32 %v108, 0.5
    %v113 = vmul.f32 %v105, 0.70710677
    %v114 = vmul.f32 %v108, 0.70710677
    %v115 = vand.u32 2147483647, %v113
    %v116 = vand.u32 2147483647, %v114
    %v117 = vmul.f32 %v115, 0.3275911
    %v118 = vmul.f32 %v116, 0.3275911
    %v119 = vadd.f32 %v117, 1.0
    %v120 = vadd.f32 %v118, 1.0
    %v121 = vrcp.pop %v119
    %v122 = vmul.f32 1.0, %v121
    %v123 = vrcp.pop %v120
    %v124 = vmul.f32 1.0, %v123
    %v125 = vmul.f32 %v122, 1.0614054
    %v126 = vmul.f32 %v124, 1.0614054
    %v127 = vadd.f32 %v125, -1.4531521
    %v128 = vadd.f32 %v126, -1.4531521
    %v129 = vmul.f32 %v127, %v122
    %v130 = vmul.f32 %v128, %v124
    %v131 = vadd.f32 %v129, 1.4214138
    %v132 = vadd.f32 %v130, 1.4214138
    %v133 = vmul.f32 %v131, %v122
    %v134 = vmul.f32 %v132, %v124
    %v135 = vadd.f32 %v133, -0.28449672
    %v136 = vadd.f32 %v134, -0.28449672
    %v137 = vmul.f32 %v135, %v122
    %v138 = vmul.f32 %v136, %v124
    %v139 = vadd.f32 %v137, 0.2548296
    %v140 = vadd.f32 %v138, 0.2548296
    %v141 = vmul.f32 %v139, %v122
    %v142 = vmul.f32 %v140, %v124
    %v143 = vsub.f32 0.0, %v115
    %v144 = vsub.f32 0.0, %v116
    %v145 = vmul.f32 %v143, %v115
    %v146 = vmul.f32 %v144, %v116
    %v147 = vmul.f32 %v145, 1.442695
    %v148 = vpow.pop %v147
    %v149 = vmul.f32 %v146, 1.442695
    %v150 = vpow.pop %v149
    %v151 = vmul.f32 %v141, %v148
    %v152 = vmul.f32 %v142, %v150
    %v153 = vsub.f32 1.0, %v151
    %v154 = vsub.f32 1.0, %v152
    %vm155 = vcmp.lt.f32.partialorder %v113, 0.0
    %vm156 = vcmp.lt.f32.partialorder %v114, 0.0
    %v157 = vsub.f32 0.0, %v153
    %v158 = vsub.f32 0.0, %v154
    %v159 = vsel %vm155, %v157, %v153
    %v160 = vsel %vm156, %v158, %v154
    %v161 = vadd.f32 %v159, 1.0
    %v162 = vadd.f32 %v160, 1.0
    %v163 = vmul.f32 %v111, %v161
    %v164 = vmul.f32 %v112, %v162
    %v165 = vpack.c.bf16 %v164, %v163
    %v166 = vld [vmem:[#allocation2] sm:$0xf]
    %v167 = vld [vmem:[#allocation2 + $0x4] sm:$0xf]
    %v168 = vld [vmem:[#allocation2 + $0x8] sm:$0xf]
    %v169 = vld [vmem:[#allocation2 + $0xc] sm:$0xf]
    %v170 = vld [vmem:[#allocation2 + $0x10] sm:$0xf]
    %v171 = vld [vmem:[#allocation2 + $0x14] sm:$0xf]
    %v172 = vld [vmem:[#allocation2 + $0x18] sm:$0xf]
    %v173 = vld [vmem:[#allocation2 + $0x1c] sm:$0xf]
    %v174 = vld [vmem:[%s4] sm:$0x1]
    %v176 = vlaneseq
    %v177 = vshrl.u32 %v176, 7
    %v178 = vsub.s32 0, %v177
    %v179 = vrot.slane %v174, %v178
    %v189 = vunpack.c.l.b16 %v166
    %v190 = vunpack.c.l.b16 %v167
    %v191 = vunpack.c.l.b16 %v168
    %v192 = vunpack.c.l.b16 %v169
    %v193 = vunpack.c.l.b16 %v170
    %v194 = vunpack.c.l.b16 %v171
    %v195 = vunpack.c.l.b16 %v172
    %v196 = vunpack.c.l.b16 %v173
    %v197 = vpack.c.b16 %v190, %v189
    %v198 = vpack.c.b16 %v192, %v191
    %v199 = vpack.c.b16 %v194, %v193
    %v200 = vpack.c.b16 %v196, %v195
    %vm205 = vcmask 523264
    %v207 = vsel %vm205, %v165, 0
    %209 = vmatprep.subr.bf16.mxu0 0
    %210 = vmatpush1.bf16.msra.mxu0 0
    %211 = vmatprep.subr.bf16.mxu0 0
    %212 = vmatpush1.bf16.msra.mxu0 0
    %213 = vmatprep.subr.bf16.mxu0 0
    %214 = vmatpush1.bf16.msra.mxu0 0
    %215 = vmatprep.subr.bf16.mxu0 0
    %216 = vmatpush1.bf16.msra.mxu0 0
    %217 = vmatprep.subr.bf16.mxu0 0
    %218 = vmatpush1.bf16.msra.mxu0 %v200
    %219 = vmatprep.subr.bf16.mxu0 0
    %220 = vmatpush1.bf16.msra.mxu0 %v199
    %221 = vmatprep.subr.bf16.mxu0 0
    %222 = vmatpush1.bf16.msra.mxu0 %v198
    %223 = vmatprep.subr.bf16.mxu0 0
    %224 = vmatpush1.bf16.msra.mxu0 %v197
    %225 = vmatprep.subr.bf16.mxu0 0
    %226 = vmatpush2.bf16.msra.mxu0 0
    %227 = vmatprep.subr.bf16.mxu0 0
    %228 = vmatpush2.bf16.msra.mxu0 0
    %229 = vmatprep.subr.bf16.mxu0 0
    %230 = vmatpush2.bf16.msra.mxu0 0
    %231 = vmatprep.subr.bf16.mxu0 0
    %232 = vmatpush2.bf16.msra.mxu0 0
    %233 = vmatprep.subr.bf16.mxu0 0
    %234 = vmatpush2.bf16.msra.mxu0 0
    %235 = vmatprep.subr.bf16.mxu0 0
    %236 = vmatpush2.bf16.msra.mxu0 0
    %237 = vmatprep.subr.bf16.mxu0 0
    %238 = vmatpush2.bf16.msra.mxu0 0
    %239 = vmatprep.subr.bf16.mxu0 0
    %240 = vmatpush2.bf16.msra.mxu0 0
    %241 = vmatprep.mubr.bf16.mxu0 0
    %242 = vmatmul.mubr.bf16.gmra.mxu0 %v207
    %v243 = vpop.f32.mrf.mxu0
    %v244 = vadd.f32 %v179, %v243
    %v245 = vpop.f32.mrf.mxu0
    %v246 = vpop.f32.mrf.mxu0
    %v247 = vadd.f32 %v179, %v246
    %v248 = vpop.f32.mrf.mxu0
    %249 = vdwg.mxu0
    %250 = vst.msk [vmem:[#allocation5] sm:$0xff] %vm205, %v244
    %251 = vst.msk [vmem:[#allocation5 + $0x8] sm:$0xff] %vm205, %v247
    // Predicated region
    $region26: #{_lambda_.1} parent=1 // pred_check
      _
    $region27: #{_lambda_.1} parent=1 // pred_check_branch
      %253 = sbr.rel (0) target = $region29
    $region28: #{_lambda_.1} parent=1 // pred_region
      %s255 = ssub.s32 256, 256
      %256 = vsyncadd [#allocation4], %s255
      %s257 = sshll.u32 [#allocation5], 4
      %s258 = int_to_ptr.vmem [resolvable:$true] %s257
      %263 = dma.vmem_to_hbm [thread:$0]  %s258, 256, %s5, [#allocation4], 128, 128, 8
    $region29: #{_lambda_.1} parent=1 // pred_fallthru
      _
    // Predicated region
    $region30: #{_lambda_.1} parent=1 // pred_check
      _
    $region31: #{_lambda_.1} parent=1 // pred_check_branch
      %265 = sbr.rel (0) target = $region33
    $region32: #{_lambda_.1} parent=1 // pred_region
      %266 = dma.done [#allocation4], 256
    $region33: #{_lambda_.1} parent=1 // pred_fallthru
      _
    %267 = vsyncpa [#allocation3], 1
    %268 = vsyncpa [#allocation4], 1

</llo_original>
